<compile_context>
chip_gen: v6e
topology: v6e:2x2x1
jax: 0.10.0
libtpu: 0.0.40
codegen_flags: <defaults>
</compile_context>

<pallas_src>
import jax
import jax.numpy as jnp
from jax import lax
from jax.experimental import pallas as pl
from jax.experimental.pallas import tpu as pltpu

EPS = 1e-10


def _distance_kernel(support_ref, input_ref, out_ref):
    """support_ref: (S, B, D), input_ref: (B, D) -> out_ref: (B, S)."""
    # Upcast in-kernel (keeps the DMA in the caller's dtype; accumulate in f32).
    sup = support_ref[...].astype(jnp.float32)          # (S, B, D)
    x = input_ref[...].astype(jnp.float32)               # (B, D)

    # Both reductions run along the lane (last) axis over the same support vregs.
    dot = jnp.sum(sup * x[None, :, :], axis=-1)           # (S, B)  <x_b, s_{s,b}>
    ssq = jnp.sum(sup * sup, axis=-1)                      # (S, B)  ||s_{s,b}||^2

    # torch: sum_support.clamp(eps, inf).rsqrt()   (f32 clamp + EUP rsqrt)
    inv_mag = lax.rsqrt(jnp.maximum(ssq, EPS))             # (S, B)

    # Transpose only the tiny reduced tile to the final (B, S) orientation.
    out_ref[...] = (dot * inv_mag).T.astype(out_ref.dtype)


def distance_network_forward(support_set, input_image):
    """DistanceNetwork.forward.

    support_set : (seq_len, batch, D)
    input_image : (batch, D)
    returns     : (batch, seq_len)
    """
    S, B, D = support_set.shape
    assert input_image.shape == (B, D)

    out_dtype = jnp.result_type(support_set.dtype, input_image.dtype)

    return pl.pallas_call(
        _distance_kernel,
        out_shape=jax.ShapeDtypeStruct((B, S), out_dtype),
        in_specs=[
            pl.BlockSpec(memory_space=pltpu.MemorySpace.VMEM),
            pl.BlockSpec(memory_space=pltpu.MemorySpace.VMEM),
        ],
        out_specs=pl.BlockSpec(memory_space=pltpu.MemorySpace.VMEM),
    )(support_set, input_image)


if __name__ == "__main__":
    key = jax.random.PRNGKey(0)
    ks, ki = jax.random.split(key)

    # Shapes implied by the module docstring: [seq_len, batch, 64] / [batch, 64].
    S, B, D = 8, 2, 64
    support_set = jax.random.normal(ks, (S, B, D), jnp.float32)
    input_image = jax.random.normal(ki, (B, D), jnp.float32)

    out = distance_network_forward(support_set, input_image)
    out = jax.block_until_ready(out)

    # Pure-JAX reference mirroring the torch loop exactly.
    ssq_ref = jnp.sum(support_set ** 2, axis=-1)                         # (S, B)
    mag_ref = lax.rsqrt(jnp.clip(ssq_ref, EPS, None))
    dot_ref = jnp.einsum("bd,sbd->sb", input_image, support_set)         # (S, B)
    ref = (dot_ref * mag_ref).T                                          # (B, S)

    assert out.shape == (B, S)
    assert bool(jnp.all(jnp.isfinite(out)))
    assert bool(jnp.allclose(out, ref, atol=1e-5, rtol=1e-5))
    print("KERNEL_OK")
</pallas_src>

<mosaic_0001>
module attributes {stable_mosaic.version = 11 : i64} {
  func.func @_distance_kernel(%arg0: memref<8x2x64xf32, #tpu.memory_space<vmem>>, %arg1: memref<2x64xf32, #tpu.memory_space<vmem>>, %arg2: memref<2x8xf32, #tpu.memory_space<vmem>>) attributes {dimension_semantics = [], scalar_prefetch = 0 : i64, scratch_operands = 0 : i64, tpu.core_type = #tpu.core_type<tc>} {
    %c0 = arith.constant 0 : index
    %c0_0 = arith.constant 0 : index
    %c0_1 = arith.constant 0 : index
    %0 = vector.load %arg0[%c0, %c0_0, %c0_1] : memref<8x2x64xf32, #tpu.memory_space<vmem>>, vector<8x2x64xf32>
    %c0_2 = arith.constant 0 : index
    %c0_3 = arith.constant 0 : index
    %1 = vector.load %arg1[%c0_2, %c0_3] : memref<2x64xf32, #tpu.memory_space<vmem>>, vector<2x64xf32>
    %2 = vector.shape_cast %1 : vector<2x64xf32> to vector<1x2x64xf32>
    %3 = vector.broadcast %2 : vector<1x2x64xf32> to vector<8x2x64xf32>
    %4 = arith.mulf %0, %3 : vector<8x2x64xf32>
    %cst = arith.constant dense<0.000000e+00> : vector<8x2xf32>
    %5 = vector.multi_reduction <add>, %4, %cst [2] : vector<8x2x64xf32> to vector<8x2xf32>
    %6 = arith.mulf %0, %0 : vector<8x2x64xf32>
    %cst_4 = arith.constant dense<0.000000e+00> : vector<8x2xf32>
    %7 = vector.multi_reduction <add>, %6, %cst_4 [2] : vector<8x2x64xf32> to vector<8x2xf32>
    %cst_5 = arith.constant 1.000000e-10 : f32
    %8 = vector.broadcast %cst_5 : f32 to vector<8x2xf32>
    %9 = arith.maximumf %7, %8 : vector<8x2xf32>
    %10 = math.rsqrt %9 : vector<8x2xf32>
    %11 = arith.mulf %5, %10 : vector<8x2xf32>
    %12 = tpu.transpose %11, [1, 0] : vector<8x2xf32> -> vector<2x8xf32>
    %c0_6 = arith.constant 0 : index
    %c0_7 = arith.constant 0 : index
    %13 = vector.load %arg2[%c0_6, %c0_7] : memref<2x8xf32, #tpu.memory_space<vmem>>, vector<2x8xf32>
    tpu.vector_store %arg2[%c0_6, %c0_7], %12 {strides = array<i32>} : memref<2x8xf32, #tpu.memory_space<vmem>>, vector<2x8xf32>,
    return
  }
}

</mosaic_0001>

<llo_original>
// kernel: tpu_custom_call.1
$region0: #{tpu_custom_call.1}
  #allocation0 [shape = 'u32[]', space=smem, size = 0x4, offset = 0x4, fixed_abs, tag = 'smem constant byte address 0x4 - core index']
  #allocation1 [shape = 'u32[144,128]{1,0:T(1,128)}', space=vmem, size = 0x12000, scoped, tag = 'internal scratch']
  %s0 = inlined_call_operand.hbm [shape: f32[8,2,64], index: 0, kind: input, shape index: {}]
  %s1 = inlined_call_operand.hbm [shape: f32[2,64], index: 1, kind: input, shape index: {}]
  %s2 = inlined_call_operand.hbm [shape: f32[2,8], index: 2, kind: output, shape index: {}]
  %s3 = sld [smem:[#allocation0]]
  $region26: #{tpu_custom_call.1} parent=0
    _
  %s5 = ssub.s32 1, %s3
  %s6 = scalar_select 0, %s5, %s3
  $region1: #{tpu_custom_call.1} parent=0
    #allocation2 [shape = 'u8[8192]{0}', space=vmem, size = 0x2000, scoped, tag = 'input window, operand 0, single buffered']
    #allocation3 [shape = 's32[1]{0}', space=sflag, size = 0x4, scoped, tag = 'scoped memory for tpu_custom_call.1']
    #allocation4 [shape = 's32[1]{0}', space=sflag, size = 0x4, scoped, tag = 'scoped memory for tpu_custom_call.1']
    #allocation5 [shape = 'u8[1024]{0}', space=vmem, size = 0x400, scoped, tag = 'input window, operand 1, single buffered']
    #allocation6 [shape = 's32[1]{0}', space=sflag, size = 0x4, scoped, tag = 'scoped memory for tpu_custom_call.1']
    #allocation7 [shape = 'u8[1024]{0}', space=vmem, size = 0x400, scoped, tag = 'output window, operand 0, single buffered']
    %7 = vsyncpa [#allocation3], 0
    %8 = vsyncpa [#allocation6], 0
    %9 = vsyncpa [#allocation4], 0
    // Predicated region
    $region2: #{tpu_custom_call.1} parent=1 // pred_check
      _
    $region3: #{tpu_custom_call.1} parent=1 // pred_check_branch
      %11 = sbr.rel (0) target = $region5
    $region4: #{tpu_custom_call.1} parent=1 // pred_region
      %s13 = ssub.s32 256, 256
      %14 = vsyncadd [#allocation3], %s13
      %s15 = sshll.u32 [#allocation2], 4
      %s16 = int_to_ptr.vmem [resolvable:$true] %s15
      %21 = dma.hbm_to_vmem [thread:$0]  %s0, 256, %s16, [#allocation3], 32, 32, 2
    $region5: #{tpu_custom_call.1} parent=1 // pred_fallthru
      _
    // Predicated region
    $region6: #{tpu_custom_call.1} parent=1 // pred_check
      _
    $region7: #{tpu_custom_call.1} parent=1 // pred_check_branch
      %23 = sbr.rel (0) target = $region9
    $region8: #{tpu_custom_call.1} parent=1 // pred_region
      %s25 = ssub.s32 32, 32
      %26 = vsyncadd [#allocation6], %s25
      %s28 = sshll.u32 [#allocation5], 4
      %s29 = int_to_ptr.vmem [resolvable:$true] %s28
      %31 = dma.hbm_to_vmem [thread:$0]  %s1, 32, %s29, [#allocation6]
    $region9: #{tpu_custom_call.1} parent=1 // pred_fallthru
      _
    // Predicated region
    $region10: #{tpu_custom_call.1} parent=1 // pred_check
      _
    $region11: #{tpu_custom_call.1} parent=1 // pred_check_branch
      %33 = sbr.rel (0) target = $region13
    $region12: #{tpu_custom_call.1} parent=1 // pred_region
      %34 = dma.done [#allocation3], 256
    $region13: #{tpu_custom_call.1} parent=1 // pred_fallthru
      _
    // Predicated region
    $region14: #{tpu_custom_call.1} parent=1 // pred_check
      _
    $region15: #{tpu_custom_call.1} parent=1 // pred_check_branch
      %36 = sbr.rel (0) target = $region17
    $region16: #{tpu_custom_call.1} parent=1 // pred_region
      %37 = dma.done [#allocation6], 32
    $region17: #{tpu_custom_call.1} parent=1 // pred_fallthru
      _
    %v38 = vld [vmem:[#allocation2] sm:$0x3]
    %v39 = vld [vmem:[#allocation2 + $0x2] sm:$0x3]
    %v40 = vld [vmem:[#allocation2 + $0x4] sm:$0x3]
    %v41 = vld [vmem:[#allocation2 + $0x6] sm:$0x3]
    %v42 = vld [vmem:[#allocation2 + $0x8] sm:$0x3]
    %v43 = vld [vmem:[#allocation2 + $0xa] sm:$0x3]
    %v44 = vld [vmem:[#allocation2 + $0xc] sm:$0x3]
    %v45 = vld [vmem:[#allocation2 + $0xe] sm:$0x3]
    %v46 = vld [vmem:[#allocation5] sm:$0x3]
    %v47 = vmul.f32 %v38, %v46
    %v48 = vmul.f32 %v39, %v46
    %v49 = vmul.f32 %v40, %v46
    %v50 = vmul.f32 %v41, %v46
    %v51 = vmul.f32 %v42, %v46
    %v52 = vmul.f32 %v43, %v46
    %v53 = vmul.f32 %v44, %v46
    %v54 = vmul.f32 %v45, %v46
    %vm55 = vcmask 517120
    %v56 = vsel %vm55, %v47, 0.0
    %57 = vadd.xlane.f32.xlu0 %v56
    %v58 = vpop.xlane.xlu0 %57
    %v59 = vsel %vm55, %v48, 0.0
    %60 = vadd.xlane.f32.xlu0 %v59
    %v61 = vpop.xlane.xlu0 %60
    %v62 = vsel %vm55, %v49, 0.0
    %63 = vadd.xlane.f32.xlu0 %v62
    %v64 = vpop.xlane.xlu0 %63
    %v65 = vsel %vm55, %v50, 0.0
    %66 = vadd.xlane.f32.xlu0 %v65
    %v67 = vpop.xlane.xlu0 %66
    %v68 = vsel %vm55, %v51, 0.0
    %69 = vadd.xlane.f32.xlu0 %v68
    %v70 = vpop.xlane.xlu0 %69
    %v71 = vsel %vm55, %v52, 0.0
    %72 = vadd.xlane.f32.xlu0 %v71
    %v73 = vpop.xlane.xlu0 %72
    %v74 = vsel %vm55, %v53, 0.0
    %75 = vadd.xlane.f32.xlu0 %v74
    %v76 = vpop.xlane.xlu0 %75
    %v77 = vsel %vm55, %v54, 0.0
    %78 = vadd.xlane.f32.xlu0 %v77
    %v79 = vpop.xlane.xlu0 %78
    %v80 = vmul.f32 %v38, %v38
    %v81 = vmul.f32 %v39, %v39
    %v82 = vmul.f32 %v40, %v40
    %v83 = vmul.f32 %v41, %v41
    %v84 = vmul.f32 %v42, %v42
    %v85 = vmul.f32 %v43, %v43
    %v86 = vmul.f32 %v44, %v44
    %v87 = vmul.f32 %v45, %v45
    %v88 = vsel %vm55, %v80, 0.0
    %89 = vadd.xlane.f32.xlu0 %v88
    %v90 = vpop.xlane.xlu0 %89
    %v91 = vsel %vm55, %v81, 0.0
    %92 = vadd.xlane.f32.xlu0 %v91
    %v93 = vpop.xlane.xlu0 %92
    %v94 = vsel %vm55, %v82, 0.0
    %95 = vadd.xlane.f32.xlu0 %v94
    %v96 = vpop.xlane.xlu0 %95
    %v97 = vsel %vm55, %v83, 0.0
    %98 = vadd.xlane.f32.xlu0 %v97
    %v99 = vpop.xlane.xlu0 %98
    %v100 = vsel %vm55, %v84, 0.0
    %101 = vadd.xlane.f32.xlu0 %v100
    %v102 = vpop.xlane.xlu0 %101
    %v103 = vsel %vm55, %v85, 0.0
    %104 = vadd.xlane.f32.xlu0 %v103
    %v105 = vpop.xlane.xlu0 %104
    %v106 = vsel %vm55, %v86, 0.0
    %107 = vadd.xlane.f32.xlu0 %v106
    %v108 = vpop.xlane.xlu0 %107
    %v109 = vsel %vm55, %v87, 0.0
    %110 = vadd.xlane.f32.xlu0 %v109
    %v111 = vpop.xlane.xlu0 %110
    %v112 = vmax.f32 %v90, 1e-10
    %v113 = vmax.f32 %v93, 1e-10
    %v114 = vmax.f32 %v96, 1e-10
    %v115 = vmax.f32 %v99, 1e-10
    %v116 = vmax.f32 %v102, 1e-10
    %v117 = vmax.f32 %v105, 1e-10
    %v118 = vmax.f32 %v108, 1e-10
    %v119 = vmax.f32 %v111, 1e-10
    %v120 = vrsqrt.pop %v112
    %v121 = vrsqrt.pop %v113
    %v122 = vrsqrt.pop %v114
    %v123 = vrsqrt.pop %v115
    %v124 = vrsqrt.pop %v116
    %v125 = vrsqrt.pop %v117
    %v126 = vrsqrt.pop %v118
    %v127 = vrsqrt.pop %v119
    %v128 = vmul.f32 %v58, %v120
    %v129 = vmul.f32 %v61, %v121
    %v130 = vmul.f32 %v64, %v122
    %v131 = vmul.f32 %v67, %v123
    %v132 = vmul.f32 %v70, %v124
    %v133 = vmul.f32 %v73, %v125
    %v134 = vmul.f32 %v76, %v126
    %v135 = vmul.f32 %v79, %v127
    %v144 = vlaneseq
    %v145 = vand.u32 %v144, 127
    %v146 = vlaneseq
    %v147 = vshrl.u32 %v146, 7
    %v148 = vsub.s32 %v145, %v147
    %v149 = vrot.slane %v128, %v148
    %v150 = vlaneseq
    %v151 = vshrl.u32 %v150, 7
    %v152 = vsub.s32 %v145, %v151
    %v153 = vrot.slane %v129, %v152
    %v154 = vlaneseq
    %v155 = vshrl.u32 %v154, 7
    %v156 = vsub.s32 %v145, %v155
    %v157 = vrot.slane %v130, %v156
    %v158 = vlaneseq
    %v159 = vshrl.u32 %v158, 7
    %v160 = vsub.s32 %v145, %v159
    %v161 = vrot.slane %v131, %v160
    %v162 = vlaneseq
    %v163 = vshrl.u32 %v162, 7
    %v164 = vsub.s32 %v145, %v163
    %v165 = vrot.slane %v132, %v164
    %v166 = vlaneseq
    %v167 = vshrl.u32 %v166, 7
    %v168 = vsub.s32 %v145, %v167
    %v169 = vrot.slane %v133, %v168
    %v170 = vlaneseq
    %v171 = vshrl.u32 %v170, 7
    %v172 = vsub.s32 %v145, %v171
    %v173 = vrot.slane %v134, %v172
    %v174 = vlaneseq
    %v175 = vshrl.u32 %v174, 7
    %v176 = vsub.s32 %v145, %v175
    %v177 = vrot.slane %v135, %v176
    %vm178 = vcmask 1041409
    %v179 = vsel %vm178, %v153, %v149
    %vm180 = vcmask 1042434
    %v181 = vsel %vm180, %v157, %v179
    %vm182 = vcmask 1043459
    %v183 = vsel %vm182, %v161, %v181
    %vm184 = vcmask 1044484
    %v185 = vsel %vm184, %v165, %v183
    %vm186 = vcmask 1045509
    %v187 = vsel %vm186, %v169, %v185
    %vm188 = vcmask 1046534
    %v189 = vsel %vm188, %v173, %v187
    %vm190 = vcmask 1047559
    %v191 = vsel %vm190, %v177, %v189
    %193 = vxpose.xlu0.b32.start [1/16] %v191, 128
    %194 = vxpose.xlu0.b32.cont [2/16] 0.0, 128
    %195 = vxpose.xlu0.b32.cont [3/16] 0.0, 128
    %196 = vxpose.xlu0.b32.cont [4/16] 0.0, 128
    %197 = vxpose.xlu0.b32.cont [5/16] 0.0, 128
    %198 = vxpose.xlu0.b32.cont [6/16] 0.0, 128
    %199 = vxpose.xlu0.b32.cont [7/16] 0.0, 128
    %200 = vxpose.xlu0.b32.cont [8/16] 0.0, 128
    %201 = vxpose.xlu0.b32.cont [9/16] 0.0, 128
    %202 = vxpose.xlu0.b32.cont [10/16] 0.0, 128
    %203 = vxpose.xlu0.b32.cont [11/16] 0.0, 128
    %204 = vxpose.xlu0.b32.cont [12/16] 0.0, 128
    %205 = vxpose.xlu0.b32.cont [13/16] 0.0, 128
    %206 = vxpose.xlu0.b32.cont [14/16] 0.0, 128
    %207 = vxpose.xlu0.b32.cont [15/16] 0.0, 128
    %208 = vxpose.xlu0.b32.end [16/16] 0.0, 128
    %v209 = vpop.trf.xlu0
    %v210 = vpop.trf.xlu0
    %v211 = vpop.trf.xlu0
    %v212 = vpop.trf.xlu0
    %v213 = vpop.trf.xlu0
    %v214 = vpop.trf.xlu0
    %v215 = vpop.trf.xlu0
    %v216 = vpop.trf.xlu0
    %v217 = vpop.trf.xlu0
    %v218 = vpop.trf.xlu0
    %v219 = vpop.trf.xlu0
    %v220 = vpop.trf.xlu0
    %v221 = vpop.trf.xlu0
    %v222 = vpop.trf.xlu0
    %v223 = vpop.trf.xlu0
    %v224 = vpop.trf.xlu0
    %vm225 = vcmask 58368
    %226 = vst.msk [vmem:[#allocation7] sm:$0x3] %vm225, %v209
    // Predicated region
    $region18: #{tpu_custom_call.1} parent=1 // pred_check
      _
    $region19: #{tpu_custom_call.1} parent=1 // pred_check_branch
      %228 = sbr.rel (0) target = $region21
    $region20: #{tpu_custom_call.1} parent=1 // pred_region
      %s230 = ssub.s32 32, 32
      %231 = vsyncadd [#allocation4], %s230
      %s233 = sshll.u32 [#allocation7], 4
      %s234 = int_to_ptr.vmem [resolvable:$true] %s233
      %236 = dma.vmem_to_hbm [thread:$0]  %s234, 32, %s2, [#allocation4]
    $region21: #{tpu_custom_call.1} parent=1 // pred_fallthru
      _
    // Predicated region
    $region22: #{tpu_custom_call.1} parent=1 // pred_check
      _
    $region23: #{tpu_custom_call.1} parent=1 // pred_check_branch
      %238 = sbr.rel (0) target = $region25
    $region24: #{tpu_custom_call.1} parent=1 // pred_region
      %239 = dma.done [#allocation4], 32
    $region25: #{tpu_custom_call.1} parent=1 // pred_fallthru
      _
    %240 = vsyncpa [#allocation3], 1
    %241 = vsyncpa [#allocation6], 1
    %242 = vsyncpa [#allocation4], 1

</llo_original>
